<compile_context>
chip_gen: v7x
topology: tpu7x:2x2x1
jax: 0.10.0
libtpu: 0.0.40
codegen_flags: <defaults>
</compile_context>

<pallas_src>
import functools
from typing import NamedTuple

import numpy as np

import jax
import jax.numpy as jnp
from jax.experimental import pallas as pl
from jax.experimental.pallas import tpu as pltpu


def _round_up(x, m):
    return (x + m - 1) // m * m


def _cdiv(a, b):
    return -(-a // b)


# ---------------------------------------------------------------------------
# Parameter packing (done ONCE, outside the per-call path).
# ---------------------------------------------------------------------------
class PackedDecoderParams(NamedTuple):
    w1: jax.Array   # [zp, hp]      dot dtype (bf16 by default)
    b1: jax.Array   # [1, hp]       f32
    wh: jax.Array   # [hp, 2*xp]    dot dtype; cols [0,xp)=mu head, [xp,2xp)=sigma head
    bh: jax.Array   # [1, 2*xp]     f32
    z_dim: int
    x_dim: int


def pack_decoder_params(w1, b1, wmu, bmu, wsig, bsig, *, dot_dtype=jnp.bfloat16):
    """Pad to 128-lane multiples and fuse the mu/sigma heads. Call once.

    Inputs use the [in, out] layout (pre-transposed vs. PyTorch's [out, in]);
    biases may be [out] or [1, out].
    """
    z_dim, h_dim = w1.shape
    x_dim = wmu.shape[1]
    zp = _round_up(z_dim, 128)
    hp = _round_up(h_dim, 128)
    xp = _round_up(x_dim, 128)
    f32 = jnp.float32

    b1 = jnp.reshape(b1, (1, h_dim)).astype(f32)
    bmu = jnp.reshape(bmu, (1, x_dim)).astype(f32)
    bsig = jnp.reshape(bsig, (1, x_dim)).astype(f32)

    # Zero padding is inert: padded z lanes hit zero W1 rows, padded hidden
    # columns get tanh(0 + 0) = 0 and multiply zero rows of the fused head.
    w1_p = jnp.zeros((zp, hp), dot_dtype).at[:z_dim, :h_dim].set(w1.astype(dot_dtype))
    b1_p = jnp.zeros((1, hp), f32).at[:, :h_dim].set(b1)
    wh_p = (
        jnp.zeros((hp, 2 * xp), dot_dtype)
        .at[:h_dim, :x_dim].set(wmu.astype(dot_dtype))
        .at[:h_dim, xp:xp + x_dim].set(wsig.astype(dot_dtype))
    )
    bh_p = (
        jnp.zeros((1, 2 * xp), f32)
        .at[:, :x_dim].set(bmu)
        .at[:, xp:xp + x_dim].set(bsig)
    )
    return PackedDecoderParams(w1_p, b1_p, wh_p, bh_p, int(z_dim), int(x_dim))


# ---------------------------------------------------------------------------
# Kernel.
# ---------------------------------------------------------------------------
def _decoder_kernel(z_ref, w1_ref, b1_ref, wh_ref, bh_ref, mu_ref, sig_ref, *, xp):
    w1 = w1_ref[...]
    wh = wh_ref[...]
    dot_dtype = w1.dtype          # bf16 (or f32 for the exact path)

    # Hidden layer: MXU matmul (f32 accumulate) + f32 bias + f32 tanh (EUP).
    h = jnp.tanh(
        jnp.dot(z_ref[...].astype(dot_dtype), w1, preferred_element_type=jnp.float32)
        + b1_ref[...]
    )
    # Fused heads: one MXU pass producing [mu | log_sigma_sq], each half
    # 128-lane aligned so the slices below are free (no relayout).
    y = (
        jnp.dot(h.astype(dot_dtype), wh, preferred_element_type=jnp.float32)
        + bh_ref[...]
    )
    mu_ref[...] = y[:, :xp]               # identity head
    sig_ref[...] = jnp.exp(y[:, xp:])     # exp only on the sigma half (EUP)


# ---------------------------------------------------------------------------
# pallas_call construction + forward wrapper.
# ---------------------------------------------------------------------------
_UNPROBED = object()
_weight_pipeline_mode = _UNPROBED   # resolved lazily on first call, then cached


def _build_decoder_call(*, tile_b, grid_b, zp, hp, xp, out_dtype,
                        weight_mode, compiler_params, cost_estimate):
    two_xp = 2 * xp
    wkw = {} if weight_mode is None else {"pipeline_mode": weight_mode}
    return pl.pallas_call(
        functools.partial(_decoder_kernel, xp=xp),
        out_shape=(
            jax.ShapeDtypeStruct((grid_b * tile_b, xp), out_dtype),   # mu
            jax.ShapeDtypeStruct((grid_b * tile_b, xp), out_dtype),   # sigma_sq
        ),
        grid=(grid_b,),
        in_specs=[
            pl.BlockSpec((tile_b, zp), lambda i: (i, 0)),            # z: tiled over batch
            pl.BlockSpec((zp, hp), lambda i: (0, 0), **wkw),         # W1 (VMEM resident)
            pl.BlockSpec((1, hp), lambda i: (0, 0), **wkw),          # b1
            pl.BlockSpec((hp, two_xp), lambda i: (0, 0), **wkw),     # fused [Wmu|Wsig]
            pl.BlockSpec((1, two_xp), lambda i: (0, 0), **wkw),      # fused [bmu|bsig]
        ],
        out_specs=(
            pl.BlockSpec((tile_b, xp), lambda i: (i, 0)),
            pl.BlockSpec((tile_b, xp), lambda i: (i, 0)),
        ),
        compiler_params=compiler_params,
        cost_estimate=cost_estimate,
    )


def decoder_forward(z, params: PackedDecoderParams, *, max_tile_b=512):
    """z: [B, z_dim] f32; params from pack_decoder_params. Returns (mu, sigma_sq)."""
    global _weight_pipeline_mode

    B, z_dim = z.shape
    if z_dim != params.z_dim:
        raise ValueError(f"z_dim mismatch: {z_dim} vs packed {params.z_dim}")
    zp, hp = params.w1.shape
    two_xp = params.wh.shape[1]
    xp = two_xp // 2
    x_dim = params.x_dim
    f32 = jnp.float32

    # --- batch tiling: minimal padding, and >=2 grid steps for v7x's 2 TCs ---
    n_tiles = max(1, _cdiv(B, max_tile_b))
    if n_tiles == 1 and B >= 128:
        n_tiles = 2
    tile_b = _round_up(_cdiv(B, n_tiles), 8)
    grid_b = _cdiv(B, tile_b)
    Bp = grid_b * tile_b

    # Only the activation is padded per call (weights were packed once).
    if (Bp, zp) == (B, z_dim):
        z_p = z.astype(f32)
    else:
        z_p = jnp.zeros((Bp, zp), f32).at[:B, :z_dim].set(z.astype(f32))

    # --- advisory cost + VMEM budgeting ---
    itemsize = jnp.dtype(params.w1.dtype).itemsize
    flops = 2 * Bp * hp * (zp + two_xp)
    transcendentals = Bp * (hp + xp)            # tanh on hp cols, exp on xp cols
    bytes_accessed = (
        4 * z_p.size
        + itemsize * (params.w1.size + params.wh.size)
        + 4 * (params.b1.size + params.bh.size)
        + 4 * 2 * Bp * xp
    )
    cost = pl.CostEstimate(flops=flops, transcendentals=transcendentals,
                           bytes_accessed=bytes_accessed)

    vmem_est = (
        2 * tile_b * zp * 4                     # z tile, double-buffered
        + 2 * 2 * tile_b * xp * 4               # mu/sigma tiles, double-buffered
        + (zp * hp + hp * two_xp) * itemsize    # resident weights (single-buffered)
        + (hp + two_xp) * 4                     # biases
        + tile_b * (hp + two_xp) * 4            # f32 intermediates (h, y)
    )
    ckw = dict(dimension_semantics=("parallel",))
    if vmem_est > (12 << 20):
        # Raise the scoped-VMEM limit only when needed; keep headroom and stay
        # under v7x's 64 MiB physical VMEM.
        ckw["vmem_limit_bytes"] = int(min(2 * vmem_est, 56 << 20))
    compiler_params = pltpu.CompilerParams(**ckw)

    def run(weight_mode):
        call = _build_decoder_call(
            tile_b=tile_b, grid_b=grid_b, zp=zp, hp=hp, xp=xp, out_dtype=f32,
            weight_mode=weight_mode, compiler_params=compiler_params,
            cost_estimate=cost)
        return call(z_p, params.w1, params.b1, params.wh, params.bh)

    # Grid-invariant weights don't need double buffering -> pl.Buffered(1).
    # Probe once; fall back to default buffering if this Pallas rejects it.
    if _weight_pipeline_mode is _UNPROBED:
        try:
            mode = pl.Buffered(1)
            outs = run(mode)
            jax.block_until_ready(outs)
            _weight_pipeline_mode = mode
        except Exception:
            _weight_pipeline_mode = None
            outs = run(None)
    else:
        outs = run(_weight_pipeline_mode)

    mu_p, sig_p = outs
    # 128-aligned (offset-0) views; only the trailing lanes are trimmed.
    return mu_p[:B, :x_dim], sig_p[:B, :x_dim]


# ---------------------------------------------------------------------------
# Synthetic parameters + self-test.
# ---------------------------------------------------------------------------
def init_params(key, z_dim, h_dim, x_dim):
    """Deterministic synthetic params in [in, out] layout; biases [1, out]."""
    k1, k2, k3, k4, k5, k6 = jax.random.split(key, 6)
    scale = 0.1
    w1   = scale * jax.random.normal(k1, (z_dim, h_dim), jnp.float32)
    b1   = scale * jax.random.normal(k2, (1, h_dim), jnp.float32)
    wmu  = scale * jax.random.normal(k3, (h_dim, x_dim), jnp.float32)
    bmu  = scale * jax.random.normal(k4, (1, x_dim), jnp.float32)
    wsig = scale * jax.random.normal(k5, (h_dim, x_dim), jnp.float32)
    bsig = scale * jax.random.normal(k6, (1, x_dim), jnp.float32)
    return w1, b1, wmu, bmu, wsig, bsig


if __name__ == "__main__":
    # Small shapes consistent with the module: batch=8, z_dim=8, h_dim=32, x_dim=16.
    # (At these tiny sizes the call is launch/DMA-latency bound; a plain-JAX
    #  path would normally be preferred below B~64 — the kernel is exercised
    #  here regardless.)
    B, z_dim, h_dim, x_dim = 8, 8, 32, 16

    key = jax.random.PRNGKey(0)
    kz, kp = jax.random.split(key)
    z = jax.random.normal(kz, (B, z_dim), jnp.float32)
    raw_params = init_params(kp, z_dim, h_dim, x_dim)

    # High-precision numpy reference (same math as the PyTorch forward).
    w1n, b1n, wmun, bmun, wsign, bsign = (
        np.asarray(p, np.float64) for p in raw_params)
    zn = np.asarray(z, np.float64)
    h_ref = np.tanh(zn @ w1n + b1n)
    mu_ref = h_ref @ wmun + bmun
    sig_ref = np.exp(h_ref @ wsign + bsign)

    # Exact-math path (f32 matmuls) — tight check of packing/kernel math.
    packed_f32 = pack_decoder_params(*raw_params, dot_dtype=jnp.float32)
    mu32, sig32 = decoder_forward(z, packed_f32)
    jax.block_until_ready((mu32, sig32))
    assert mu32.shape == (B, x_dim) and sig32.shape == (B, x_dim)
    assert np.allclose(np.asarray(mu32), mu_ref, rtol=2e-3, atol=2e-3), "mu (f32) mismatch"
    assert np.allclose(np.asarray(sig32), sig_ref, rtol=2e-3, atol=2e-3), "sigma_sq (f32) mismatch"

    # Default fast path: bf16 MXU operands, f32 accumulate/elementwise.
    packed = pack_decoder_params(*raw_params)           # dot_dtype=bf16
    mu, sigma_sq = decoder_forward(z, packed)
    jax.block_until_ready((mu, sigma_sq))
    assert mu.shape == (B, x_dim) and sigma_sq.shape == (B, x_dim)
    assert np.allclose(np.asarray(mu), mu_ref, rtol=5e-2, atol=5e-2), "mu (bf16) mismatch"
    assert np.allclose(np.asarray(sigma_sq), sig_ref, rtol=5e-2, atol=5e-2), "sigma_sq (bf16) mismatch"

    print("KERNEL_OK")
</pallas_src>

<mosaic_0001>
module attributes {stable_mosaic.version = 11 : i64} {
  func.func @_decoder_kernel(%arg0: i32, %arg1: memref<8x128xf32, #tpu.memory_space<vmem>>, %arg2: memref<128x128xf32, #tpu.memory_space<vmem>>, %arg3: memref<1x128xf32, #tpu.memory_space<vmem>>, %arg4: memref<128x256xf32, #tpu.memory_space<vmem>>, %arg5: memref<1x256xf32, #tpu.memory_space<vmem>>, %arg6: memref<8x128xf32, #tpu.memory_space<vmem>>, %arg7: memref<8x128xf32, #tpu.memory_space<vmem>>) attributes {dimension_semantics = [#tpu.dimension_semantics<parallel>], iteration_bounds = array<i64: 1>, scalar_prefetch = 0 : i64, scratch_operands = 0 : i64, tpu.core_type = #tpu.core_type<tc>, window_params = [{transform_indices = @transform_0, window_bounds = array<i64: 8, 128>}, {pipeline_mode = #tpu.pipeline_mode<synchronous>, transform_indices = @transform_1, window_bounds = array<i64: 128, 128>}, {pipeline_mode = #tpu.pipeline_mode<synchronous>, transform_indices = @transform_2, window_bounds = array<i64: 1, 128>}, {pipeline_mode = #tpu.pipeline_mode<synchronous>, transform_indices = @transform_3, window_bounds = array<i64: 128, 256>}, {pipeline_mode = #tpu.pipeline_mode<synchronous>, transform_indices = @transform_4, window_bounds = array<i64: 1, 256>}, {transform_indices = @transform_5, window_bounds = array<i64: 8, 128>}, {transform_indices = @transform_6, window_bounds = array<i64: 8, 128>}]} {
    %c0 = arith.constant 0 : index
    %c0_0 = arith.constant 0 : index
    %0 = vector.load %arg2[%c0, %c0_0] : memref<128x128xf32, #tpu.memory_space<vmem>>, vector<128x128xf32>
    %c0_1 = arith.constant 0 : index
    %c0_2 = arith.constant 0 : index
    %1 = vector.load %arg4[%c0_1, %c0_2] : memref<128x256xf32, #tpu.memory_space<vmem>>, vector<128x256xf32>
    %c0_3 = arith.constant 0 : index
    %c0_4 = arith.constant 0 : index
    %2 = vector.load %arg1[%c0_3, %c0_4] : memref<8x128xf32, #tpu.memory_space<vmem>>, vector<8x128xf32>
    %cst = arith.constant dense<0.000000e+00> : vector<8x128xf32>
    %3 = tpu.matmul %2, %0, %cst {dimension_numbers = #tpu.dot_dimension_numbers<[1], [0], [0], [1], [0, 0, 1, 1], [], []>} : vector<8x128xf32>, vector<128x128xf32>, vector<8x128xf32> -> vector<8x128xf32>
    %c0_5 = arith.constant 0 : index
    %c0_6 = arith.constant 0 : index
    %4 = vector.load %arg3[%c0_5, %c0_6] : memref<1x128xf32, #tpu.memory_space<vmem>>, vector<1x128xf32>
    %5 = vector.broadcast %4 : vector<1x128xf32> to vector<8x128xf32>
    %6 = arith.addf %3, %5 : vector<8x128xf32>
    %7 = math.tanh %6 : vector<8x128xf32>
    %cst_7 = arith.constant dense<0.000000e+00> : vector<8x256xf32>
    %8 = tpu.matmul %7, %1, %cst_7 {dimension_numbers = #tpu.dot_dimension_numbers<[1], [0], [0], [1], [0, 0, 1, 1], [], []>} : vector<8x128xf32>, vector<128x256xf32>, vector<8x256xf32> -> vector<8x256xf32>
    %c0_8 = arith.constant 0 : index
    %c0_9 = arith.constant 0 : index
    %9 = vector.load %arg5[%c0_8, %c0_9] : memref<1x256xf32, #tpu.memory_space<vmem>>, vector<1x256xf32>
    %10 = vector.broadcast %9 : vector<1x256xf32> to vector<8x256xf32>
    %11 = arith.addf %8, %10 : vector<8x256xf32>
    %12 = vector.extract_strided_slice %11 {offsets = [0, 0], sizes = [8, 128], strides = [1, 1]} : vector<8x256xf32> to vector<8x128xf32>
    %c0_10 = arith.constant 0 : index
    %c0_11 = arith.constant 0 : index
    %13 = vector.load %arg6[%c0_10, %c0_11] : memref<8x128xf32, #tpu.memory_space<vmem>>, vector<8x128xf32>
    tpu.vector_store %arg6[%c0_10, %c0_11], %12 {strides = array<i32>} : memref<8x128xf32, #tpu.memory_space<vmem>>, vector<8x128xf32>,
    %14 = vector.extract_strided_slice %11 {offsets = [0, 128], sizes = [8, 128], strides = [1, 1]} : vector<8x256xf32> to vector<8x128xf32>
    %15 = math.exp %14 : vector<8x128xf32>
    %c0_12 = arith.constant 0 : index
    %c0_13 = arith.constant 0 : index
    %16 = vector.load %arg7[%c0_12, %c0_13] : memref<8x128xf32, #tpu.memory_space<vmem>>, vector<8x128xf32>
    tpu.vector_store %arg7[%c0_12, %c0_13], %15 {strides = array<i32>} : memref<8x128xf32, #tpu.memory_space<vmem>>, vector<8x128xf32>,
    return
  }
  func.func @transform_0(%arg0: i32) -> (i32, i32) {
    %c0_i32 = arith.constant 0 : i32
    %c0_i32_0 = arith.constant 0 : i32
    return %arg0, %c0_i32 : i32, i32
  }
  func.func @transform_1(%arg0: i32) -> (i32, i32) {
    %c0_i32 = arith.constant 0 : i32
    %c0_i32_0 = arith.constant 0 : i32
    %c0_i32_1 = arith.constant 0 : i32
    return %c0_i32, %c0_i32_0 : i32, i32
  }
  func.func @transform_2(%arg0: i32) -> (i32, i32) {
    %c0_i32 = arith.constant 0 : i32
    %c0_i32_0 = arith.constant 0 : i32
    %c0_i32_1 = arith.constant 0 : i32
    return %c0_i32, %c0_i32_0 : i32, i32
  }
  func.func @transform_3(%arg0: i32) -> (i32, i32) {
    %c0_i32 = arith.constant 0 : i32
    %c0_i32_0 = arith.constant 0 : i32
    %c0_i32_1 = arith.constant 0 : i32
    return %c0_i32, %c0_i32_0 : i32, i32
  }
  func.func @transform_4(%arg0: i32) -> (i32, i32) {
    %c0_i32 = arith.constant 0 : i32
    %c0_i32_0 = arith.constant 0 : i32
    %c0_i32_1 = arith.constant 0 : i32
    return %c0_i32, %c0_i32_0 : i32, i32
  }
  func.func @transform_5(%arg0: i32) -> (i32, i32) {
    %c0_i32 = arith.constant 0 : i32
    %c0_i32_0 = arith.constant 0 : i32
    return %arg0, %c0_i32 : i32, i32
  }
  func.func @transform_6(%arg0: i32) -> (i32, i32) {
    %c0_i32 = arith.constant 0 : i32
    %c0_i32_0 = arith.constant 0 : i32
    return %arg0, %c0_i32 : i32, i32
  }
}

module attributes {stable_mosaic.version = 11 : i64} {
  func.func @_decoder_kernel(%arg0: i32, %arg1: memref<8x128xf32, #tpu.memory_space<vmem>>, %arg2: memref<128x128xf32, #tpu.memory_space<vmem>>, %arg3: memref<1x128xf32, #tpu.memory_space<vmem>>, %arg4: memref<128x256xf32, #tpu.memory_space<vmem>>, %arg5: memref<1x256xf32, #tpu.memory_space<vmem>>, %arg6: memref<8x128xf32, #tpu.memory_space<vmem>>, %arg7: memref<8x128xf32, #tpu.memory_space<vmem>>) attributes {dimension_semantics = [#tpu.dimension_semantics<parallel>], iteration_bounds = array<i64: 1>, scalar_prefetch = 0 : i64, scratch_operands = 0 : i64, tpu.core_type = #tpu.core_type<tc>, window_params = [{transform_indices = @transform_0, window_bounds = array<i64: 8, 128>}, {pipeline_mode = #tpu.pipeline_mode<synchronous>, transform_indices = @transform_1, window_bounds = array<i64: 128, 128>}, {pipeline_mode = #tpu.pipeline_mode<synchronous>, transform_indices = @transform_2, window_bounds = array<i64: 1, 128>}, {pipeline_mode = #tpu.pipeline_mode<synchronous>, transform_indices = @transform_3, window_bounds = array<i64: 128, 256>}, {pipeline_mode = #tpu.pipeline_mode<synchronous>, transform_indices = @transform_4, window_bounds = array<i64: 1, 256>}, {transform_indices = @transform_5, window_bounds = array<i64: 8, 128>}, {transform_indices = @transform_6, window_bounds = array<i64: 8, 128>}]} {
    %c0 = arith.constant 0 : index
    %c0_0 = arith.constant 0 : index
    %0 = vector.load %arg2[%c0, %c0_0] : memref<128x128xf32, #tpu.memory_space<vmem>>, vector<128x128xf32>
    %c0_1 = arith.constant 0 : index
    %c0_2 = arith.constant 0 : index
    %1 = vector.load %arg4[%c0_1, %c0_2] : memref<128x256xf32, #tpu.memory_space<vmem>>, vector<128x256xf32>
    %c0_3 = arith.constant 0 : index
    %c0_4 = arith.constant 0 : index
    %2 = vector.load %arg1[%c0_3, %c0_4] : memref<8x128xf32, #tpu.memory_space<vmem>>, vector<8x128xf32>
    %cst = arith.constant dense<0.000000e+00> : vector<8x128xf32>
    %3 = tpu.matmul %2, %0, %cst {dimension_numbers = #tpu.dot_dimension_numbers<[1], [0], [0], [1], [0, 0, 1, 1], [], []>} : vector<8x128xf32>, vector<128x128xf32>, vector<8x128xf32> -> vector<8x128xf32>
    %c0_5 = arith.constant 0 : index
    %c0_6 = arith.constant 0 : index
    %4 = vector.load %arg3[%c0_5, %c0_6] : memref<1x128xf32, #tpu.memory_space<vmem>>, vector<1x128xf32>
    %5 = vector.broadcast %4 : vector<1x128xf32> to vector<8x128xf32>
    %6 = arith.addf %3, %5 : vector<8x128xf32>
    %7 = math.tanh %6 : vector<8x128xf32>
    %cst_7 = arith.constant dense<0.000000e+00> : vector<8x256xf32>
    %8 = tpu.matmul %7, %1, %cst_7 {dimension_numbers = #tpu.dot_dimension_numbers<[1], [0], [0], [1], [0, 0, 1, 1], [], []>} : vector<8x128xf32>, vector<128x256xf32>, vector<8x256xf32> -> vector<8x256xf32>
    %c0_8 = arith.constant 0 : index
    %c0_9 = arith.constant 0 : index
    %9 = vector.load %arg5[%c0_8, %c0_9] : memref<1x256xf32, #tpu.memory_space<vmem>>, vector<1x256xf32>
    %10 = vector.broadcast %9 : vector<1x256xf32> to vector<8x256xf32>
    %11 = arith.addf %8, %10 : vector<8x256xf32>
    %12 = vector.extract_strided_slice %11 {offsets = [0, 0], sizes = [8, 128], strides = [1, 1]} : vector<8x256xf32> to vector<8x128xf32>
    %c0_10 = arith.constant 0 : index
    %c0_11 = arith.constant 0 : index
    %13 = vector.load %arg6[%c0_10, %c0_11] : memref<8x128xf32, #tpu.memory_space<vmem>>, vector<8x128xf32>
    tpu.vector_store %arg6[%c0_10, %c0_11], %12 {strides = array<i32>} : memref<8x128xf32, #tpu.memory_space<vmem>>, vector<8x128xf32>,
    %14 = vector.extract_strided_slice %11 {offsets = [0, 128], sizes = [8, 128], strides = [1, 1]} : vector<8x256xf32> to vector<8x128xf32>
    %15 = math.exp %14 : vector<8x128xf32>
    %c0_12 = arith.constant 0 : index
    %c0_13 = arith.constant 0 : index
    %16 = vector.load %arg7[%c0_12, %c0_13] : memref<8x128xf32, #tpu.memory_space<vmem>>, vector<8x128xf32>
    tpu.vector_store %arg7[%c0_12, %c0_13], %15 {strides = array<i32>} : memref<8x128xf32, #tpu.memory_space<vmem>>, vector<8x128xf32>,
    return
  }
  func.func @transform_0(%arg0: i32) -> (i32, i32) {
    %c0_i32 = arith.constant 0 : i32
    %c0_i32_0 = arith.constant 0 : i32
    return %arg0, %c0_i32 : i32, i32
  }
  func.func @transform_1(%arg0: i32) -> (i32, i32) {
    %c0_i32 = arith.constant 0 : i32
    %c0_i32_0 = arith.constant 0 : i32
    %c0_i32_1 = arith.constant 0 : i32
    return %c0_i32, %c0_i32_0 : i32, i32
  }
  func.func @transform_2(%arg0: i32) -> (i32, i32) {
    %c0_i32 = arith.constant 0 : i32
    %c0_i32_0 = arith.constant 0 : i32
    %c0_i32_1 = arith.constant 0 : i32
    return %c0_i32, %c0_i32_0 : i32, i32
  }
  func.func @transform_3(%arg0: i32) -> (i32, i32) {
    %c0_i32 = arith.constant 0 : i32
    %c0_i32_0 = arith.constant 0 : i32
    %c0_i32_1 = arith.constant 0 : i32
    return %c0_i32, %c0_i32_0 : i32, i32
  }
  func.func @transform_4(%arg0: i32) -> (i32, i32) {
    %c0_i32 = arith.constant 0 : i32
    %c0_i32_0 = arith.constant 0 : i32
    %c0_i32_1 = arith.constant 0 : i32
    return %c0_i32, %c0_i32_0 : i32, i32
  }
  func.func @transform_5(%arg0: i32) -> (i32, i32) {
    %c0_i32 = arith.constant 0 : i32
    %c0_i32_0 = arith.constant 0 : i32
    return %arg0, %c0_i32 : i32, i32
  }
  func.func @transform_6(%arg0: i32) -> (i32, i32) {
    %c0_i32 = arith.constant 0 : i32
    %c0_i32_0 = arith.constant 0 : i32
    return %arg0, %c0_i32 : i32, i32
  }
}

</mosaic_0001>

<llo_original>
// kernel: tpu_custom_call.1
$region0: #{tpu_custom_call.1}
  #allocation0 [shape = 'u32[]', space=smem, size = 0x4, offset = 0x4, fixed_abs, tag = 'smem constant byte address 0x4 - core index']
  #allocation1 [shape = 'u32[144,128]{1,0:T(1,128)}', space=vmem, size = 0x12000, scoped, tag = 'internal scratch']
  %s0 = inlined_call_operand.hbm [shape: f32[8,128], index: 0, kind: input, shape index: {}]
  %s1 = inlined_call_operand.hbm [shape: f32[128,128], index: 1, kind: input, shape index: {}]
  %s2 = inlined_call_operand.vmem [shape: f32[1,128], index: 2, kind: input, shape index: {}]
  %s3 = inlined_call_operand.hbm [shape: f32[128,256], index: 3, kind: input, shape index: {}]
  %s4 = inlined_call_operand.vmem [shape: f32[1,256], index: 4, kind: input, shape index: {}]
  %s5 = inlined_call_operand.hbm [shape: f32[8,128], index: 5, kind: output, shape index: {0}]
  %s6 = inlined_call_operand.hbm [shape: f32[8,128], index: 6, kind: output, shape index: {1}]
  %7 = xla_tuple %s5, %s6
  %s8 = sld [smem:[#allocation0]]
  $region50: #{tpu_custom_call.1} parent=0
    _
  %s10 = ssub.s32 1, %s8
  %s11 = scalar_select 0, %s10, %s8
  $region1: #{tpu_custom_call.1} parent=0
    #allocation2 [shape = 'u8[4096]{0}', space=vmem, size = 0x1000, scoped, tag = 'input window, operand 0, single buffered']
    #allocation3 [shape = 's32[1]{0}', space=sflag, size = 0x4, scoped, tag = 'scoped memory for tpu_custom_call.1']
    #allocation4 [shape = 's32[1]{0}', space=sflag, size = 0x4, scoped, tag = 'scoped memory for tpu_custom_call.1']
    #allocation5 [shape = 'u8[65536]{0}', space=vmem, size = 0x10000, scoped, tag = 'input window, operand 1, single buffered']
    #allocation6 [shape = 's32[1]{0}', space=sflag, size = 0x4, scoped, tag = 'scoped memory for tpu_custom_call.1']
    #allocation7 [shape = 'u8[131072]{0}', space=vmem, size = 0x20000, scoped, tag = 'input window, operand 3, single buffered']
    #allocation8 [shape = 'u8[4096]{0}', space=vmem, size = 0x1000, scoped, tag = 'output window, operand 0, single buffered']
    #allocation9 [shape = 'u8[4096]{0}', space=vmem, size = 0x1000, scoped, tag = 'output window, operand 1, single buffered']
    #allocation10 [shape = 's32[1]{0}', space=sflag, size = 0x4, scoped, tag = 'scoped memory for tpu_custom_call.1']
    %12 = vsyncpa [#allocation3], 0
    %13 = vsyncpa [#allocation6], 0
    %14 = vsyncpa [#allocation4], 0
    %15 = vsyncpa [#allocation10], 0
    // Predicated region
    $region2: #{tpu_custom_call.1} parent=1 // pred_check
      _
    $region3: #{tpu_custom_call.1} parent=1 // pred_check_branch
      %17 = sbr.rel (0) target = $region5
    $region4: #{tpu_custom_call.1} parent=1 // pred_region
      %s19 = ssub.s32 128, 128
      %20 = vsyncadd [#allocation3], %s19
      %s22 = sshll.u32 [#allocation2], 4
      %s23 = int_to_ptr.vmem [resolvable:$true] %s22
      %25 = dma.hbm_to_vmem [thread:$0]  %s0, 128, %s23, [#allocation3]
    $region5: #{tpu_custom_call.1} parent=1 // pred_fallthru
      _
    // Predicated region
    $region6: #{tpu_custom_call.1} parent=1 // pred_check
      _
    $region7: #{tpu_custom_call.1} parent=1 // pred_check_branch
      %27 = sbr.rel (0) target = $region9
    $region8: #{tpu_custom_call.1} parent=1 // pred_region
      %s29 = ssub.s32 2048, 2048
      %30 = vsyncadd [#allocation6], %s29
      %s31 = sshll.u32 [#allocation5], 4
      %s32 = int_to_ptr.vmem [resolvable:$true] %s31
      %37 = dma.hbm_to_vmem [thread:$0]  %s1, 2048, %s32, [#allocation6], 128, 128, 8
    $region9: #{tpu_custom_call.1} parent=1 // pred_fallthru
      _
    // Predicated region
    $region10: #{tpu_custom_call.1} parent=1 // pred_check
      _
    $region11: #{tpu_custom_call.1} parent=1 // pred_check_branch
      %39 = sbr.rel (0) target = $region13
    $region12: #{tpu_custom_call.1} parent=1 // pred_region
      _
    $region13: #{tpu_custom_call.1} parent=1 // pred_fallthru
      _
    // Predicated region
    $region14: #{tpu_custom_call.1} parent=1 // pred_check
      _
    $region15: #{tpu_custom_call.1} parent=1 // pred_check_branch
      %41 = sbr.rel (0) target = $region17
    $region16: #{tpu_custom_call.1} parent=1 // pred_region
      %s43 = ssub.s32 4096, 4096
      %44 = vsyncadd [#allocation6], %s43
      %s45 = sshll.u32 [#allocation7], 4
      %s46 = int_to_ptr.vmem [resolvable:$true] %s45
      %51 = dma.hbm_to_vmem [thread:$0]  %s3, 4096, %s46, [#allocation6], 256, 256, 16
    $region17: #{tpu_custom_call.1} parent=1 // pred_fallthru
      _
    // Predicated region
    $region18: #{tpu_custom_call.1} parent=1 // pred_check
      _
    $region19: #{tpu_custom_call.1} parent=1 // pred_check_branch
      %53 = sbr.rel (0) target = $region21
    $region20: #{tpu_custom_call.1} parent=1 // pred_region
      _
    $region21: #{tpu_custom_call.1} parent=1 // pred_fallthru
      _
    // Predicated region
    $region22: #{tpu_custom_call.1} parent=1 // pred_check
      _
    $region23: #{tpu_custom_call.1} parent=1 // pred_check_branch
      %55 = sbr.rel (0) target = $region25
    $region24: #{tpu_custom_call.1} parent=1 // pred_region
      %56 = dma.done [#allocation3], 128
    $region25: #{tpu_custom_call.1} parent=1 // pred_fallthru
      _
    // Predicated region
    $region26: #{tpu_custom_call.1} parent=1 // pred_check
      _
    $region27: #{tpu_custom_call.1} parent=1 // pred_check_branch
      %58 = sbr.rel (0) target = $region29
    $region28: #{tpu_custom_call.1} parent=1 // pred_region
      %59 = dma.done [#allocation6], 2048
    $region29: #{tpu_custom_call.1} parent=1 // pred_fallthru
      _
    // Predicated region
    $region30: #{tpu_custom_call.1} parent=1 // pred_check
      _
    $region31: #{tpu_custom_call.1} parent=1 // pred_check_branch
      %61 = sbr.rel (0) target = $region33
    $region32: #{tpu_custom_call.1} parent=1 // pred_region
      %62 = dma.done [#allocation6], 4096
    $region33: #{tpu_custom_call.1} parent=1 // pred_fallthru
      _
    %v63 = vld [vmem:[#allocation5] sm:$0xff]
    %v64 = vld [vmem:[#allocation5 + $0x8] sm:$0xff]
    %v65 = vld [vmem:[#allocation5 + $0x10] sm:$0xff]
    %v66 = vld [vmem:[#allocation5 + $0x18] sm:$0xff]
    %v67 = vld [vmem:[#allocation5 + $0x20] sm:$0xff]
    %v68 = vld [vmem:[#allocation5 + $0x28] sm:$0xff]
    %v69 = vld [vmem:[#allocation5 + $0x30] sm:$0xff]
    %v70 = vld [vmem:[#allocation5 + $0x38] sm:$0xff]
    %v71 = vld [vmem:[#allocation5 + $0x40] sm:$0xff]
    %v72 = vld [vmem:[#allocation5 + $0x48] sm:$0xff]
    %v73 = vld [vmem:[#allocation5 + $0x50] sm:$0xff]
    %v74 = vld [vmem:[#allocation5 + $0x58] sm:$0xff]
    %v75 = vld [vmem:[#allocation5 + $0x60] sm:$0xff]
    %v76 = vld [vmem:[#allocation5 + $0x68] sm:$0xff]
    %v77 = vld [vmem:[#allocation5 + $0x70] sm:$0xff]
    %v78 = vld [vmem:[#allocation5 + $0x78] sm:$0xff]
    %v79 = vld [vmem:[#allocation7] sm:$0xff]
    %v80 = vld [vmem:[#allocation7 + $0x8] sm:$0xff]
    %v81 = vld [vmem:[#allocation7 + $0x10] sm:$0xff]
    %v82 = vld [vmem:[#allocation7 + $0x18] sm:$0xff]
    %v83 = vld [vmem:[#allocation7 + $0x20] sm:$0xff]
    %v84 = vld [vmem:[#allocation7 + $0x28] sm:$0xff]
    %v85 = vld [vmem:[#allocation7 + $0x30] sm:$0xff]
    %v86 = vld [vmem:[#allocation7 + $0x38] sm:$0xff]
    %v87 = vld [vmem:[#allocation7 + $0x40] sm:$0xff]
    %v88 = vld [vmem:[#allocation7 + $0x48] sm:$0xff]
    %v89 = vld [vmem:[#allocation7 + $0x50] sm:$0xff]
    %v90 = vld [vmem:[#allocation7 + $0x58] sm:$0xff]
    %v91 = vld [vmem:[#allocation7 + $0x60] sm:$0xff]
    %v92 = vld [vmem:[#allocation7 + $0x68] sm:$0xff]
    %v93 = vld [vmem:[#allocation7 + $0x70] sm:$0xff]
    %v94 = vld [vmem:[#allocation7 + $0x78] sm:$0xff]
    %v95 = vld [vmem:[#allocation7 + $0x80] sm:$0xff]
    %v96 = vld [vmem:[#allocation7 + $0x88] sm:$0xff]
    %v97 = vld [vmem:[#allocation7 + $0x90] sm:$0xff]
    %v98 = vld [vmem:[#allocation7 + $0x98] sm:$0xff]
    %v99 = vld [vmem:[#allocation7 + $0xa0] sm:$0xff]
    %v100 = vld [vmem:[#allocation7 + $0xa8] sm:$0xff]
    %v101 = vld [vmem:[#allocation7 + $0xb0] sm:$0xff]
    %v102 = vld [vmem:[#allocation7 + $0xb8] sm:$0xff]
    %v103 = vld [vmem:[#allocation7 + $0xc0] sm:$0xff]
    %v104 = vld [vmem:[#allocation7 + $0xc8] sm:$0xff]
    %v105 = vld [vmem:[#allocation7 + $0xd0] sm:$0xff]
    %v106 = vld [vmem:[#allocation7 + $0xd8] sm:$0xff]
    %v107 = vld [vmem:[#allocation7 + $0xe0] sm:$0xff]
    %v108 = vld [vmem:[#allocation7 + $0xe8] sm:$0xff]
    %v109 = vld [vmem:[#allocation7 + $0xf0] sm:$0xff]
    %v110 = vld [vmem:[#allocation7 + $0xf8] sm:$0xff]
    %v111 = vld [vmem:[#allocation2] sm:$0xff]
    %v112 = vld [vmem:[%s2] sm:$0x1]
    %v114 = vlaneseq
    %v115 = vshrl.u32 %v114, 7
    %v116 = vsub.s32 0, %v115
    %v117 = vrot.slane %v112, %v116
    %119 = vmatprep.subr.mxu0 0.0
    %120 = vmatpush1.msra.mxu0 %v63
    %121 = vmatprep.subr.mxu0 0.0
    %122 = vmatpush1.msra.mxu0 %v64
    %123 = vmatprep.subr.mxu0 0.0
    %124 = vmatpush1.msra.mxu0 %v65
    %125 = vmatprep.subr.mxu0 0.0
    %126 = vmatpush1.msra.mxu0 %v66
    %127 = vmatprep.subr.mxu0 0.0
    %128 = vmatpush1.msra.mxu0 %v67
    %129 = vmatprep.subr.mxu0 0.0
    %130 = vmatpush1.msra.mxu0 %v68
    %131 = vmatprep.subr.mxu0 0.0
    %132 = vmatpush1.msra.mxu0 %v69
    %133 = vmatprep.subr.mxu0 0.0
    %134 = vmatpush1.msra.mxu0 %v70
    %135 = vmatprep.subr.mxu0 0.0
    %136 = vmatpush1.msra.mxu0 %v71
    %137 = vmatprep.subr.mxu0 0.0
    %138 = vmatpush1.msra.mxu0 %v72
    %139 = vmatprep.subr.mxu0 0.0
    %140 = vmatpush1.msra.mxu0 %v73
    %141 = vmatprep.subr.mxu0 0.0
    %142 = vmatpush1.msra.mxu0 %v74
    %143 = vmatprep.subr.mxu0 0.0
    %144 = vmatpush1.msra.mxu0 %v75
    %145 = vmatprep.subr.mxu0 0.0
    %146 = vmatpush1.msra.mxu0 %v76
    %147 = vmatprep.subr.mxu0 0.0
    %148 = vmatpush1.msra.mxu0 %v77
    %149 = vmatprep.subr.mxu0 0.0
    %150 = vmatpush1.msra.mxu0 %v78
    %151 = vmatprep.subr.mxu0 0.0
    %152 = vmatpush1.msra.mxu0 0.0
    %153 = vmatprep.subr.mxu0 0.0
    %154 = vmatpush1.msra.mxu0 0.0
    %155 = vmatprep.subr.mxu0 0.0
    %156 = vmatpush1.msra.mxu0 0.0
    %157 = vmatprep.subr.mxu0 0.0
    %158 = vmatpush1.msra.mxu0 0.0
    %159 = vmatprep.subr.mxu0 0.0
    %160 = vmatpush1.msra.mxu0 0.0
    %161 = vmatprep.subr.mxu0 0.0
    %162 = vmatpush1.msra.mxu0 0.0
    %163 = vmatprep.subr.mxu0 0.0
    %164 = vmatpush1.msra.mxu0 0.0
    %165 = vmatprep.subr.mxu0 0.0
    %166 = vmatpush1.msra.mxu0 0.0
    %167 = vmatprep.subr.mxu0 0.0
    %168 = vmatpush1.msra.mxu0 0.0
    %169 = vmatprep.subr.mxu0 0.0
    %170 = vmatpush1.msra.mxu0 0.0
    %171 = vmatprep.subr.mxu0 0.0
    %172 = vmatpush1.msra.mxu0 0.0
    %173 = vmatprep.subr.mxu0 0.0
    %174 = vmatpush1.msra.mxu0 0.0
    %175 = vmatprep.subr.mxu0 0.0
    %176 = vmatpush1.msra.mxu0 0.0
    %177 = vmatprep.subr.mxu0 0.0
    %178 = vmatpush1.msra.mxu0 0.0
    %179 = vmatprep.subr.mxu0 0.0
    %180 = vmatpush1.msra.mxu0 0.0
    %181 = vmatprep.subr.mxu0 0.0
    %182 = vmatpush1.msra.mxu0 0.0
    %183 = vmatprep.mubr.f32.mxu0 0.0
    %184 = vmatmul.mubr.f32.gmra.mrb[0].mxu0 %v111
    %v185 = vpop.f32.mrb[0].mxu0
    %v186 = vadd.f32 %v117, %v185
    %v187 = vpop.f32.mrb[0].mxu0
    %188 = vdwg.mxu0
    %v189 = vtanh.pop %v186
    %v190 = vld [vmem:[%s4] sm:$0x3]
    %v192 = vlaneseq
    %v193 = vshrl.u32 %v192, 7
    %v194 = vsub.s32 0, %v193
    %v195 = vrot.slane %v190, %v194
    %v196 = vlaneseq
    %v197 = vshrl.u32 %v196, 7
    %v198 = vsub.s32 1, %v197
    %v199 = vrot.slane %v190, %v198
    %202 = vmatprep.subr.mxu0 %v80
    %203 = vmatpush1.msra.mxu0 %v79
    %204 = vmatprep.subr.mxu0 %v82
    %205 = vmatpush1.msra.mxu0 %v81
    %206 = vmatprep.subr.mxu0 %v84
    %207 = vmatpush1.msra.mxu0 %v83
    %208 = vmatprep.subr.mxu0 %v86
    %209 = vmatpush1.msra.mxu0 %v85
    %210 = vmatprep.subr.mxu0 %v88
    %211 = vmatpush1.msra.mxu0 %v87
    %212 = vmatprep.subr.mxu0 %v90
    %213 = vmatpush1.msra.mxu0 %v89
    %214 = vmatprep.subr.mxu0 %v92
    %215 = vmatpush1.msra.mxu0 %v91
    %216 = vmatprep.subr.mxu0 %v94
    %217 = vmatpush1.msra.mxu0 %v93
    %218 = vmatprep.subr.mxu0 %v96
    %219 = vmatpush1.msra.mxu0 %v95
    %220 = vmatprep.subr.mxu0 %v98
    %221 = vmatpush1.msra.mxu0 %v97
    %222 = vmatprep.subr.mxu0 %v100
    %223 = vmatpush1.msra.mxu0 %v99
    %224 = vmatprep.subr.mxu0 %v102
    %225 = vmatpush1.msra.mxu0 %v101
    %226 = vmatprep.subr.mxu0 %v104
    %227 = vmatpush1.msra.mxu0 %v103
    %228 = vmatprep.subr.mxu0 %v106
    %229 = vmatpush1.msra.mxu0 %v105
    %230 = vmatprep.subr.mxu0 %v108
    %231 = vmatpush1.msra.mxu0 %v107
    %232 = vmatprep.subr.mxu0 %v110
    %233 = vmatpush1.msra.mxu0 %v109
    %234 = vmatprep.subr.mxu0 0.0
    %235 = vmatpush1.msra.mxu0 0.0
    %236 = vmatprep.subr.mxu0 0.0
    %237 = vmatpush1.msra.mxu0 0.0
    %238 = vmatprep.subr.mxu0 0.0
    %239 = vmatpush1.msra.mxu0 0.0
    %240 = vmatprep.subr.mxu0 0.0
    %241 = vmatpush1.msra.mxu0 0.0
    %242 = vmatprep.subr.mxu0 0.0
    %243 = vmatpush1.msra.mxu0 0.0
    %244 = vmatprep.subr.mxu0 0.0
    %245 = vmatpush1.msra.mxu0 0.0
    %246 = vmatprep.subr.mxu0 0.0
    %247 = vmatpush1.msra.mxu0 0.0
    %248 = vmatprep.subr.mxu0 0.0
    %249 = vmatpush1.msra.mxu0 0.0
    %250 = vmatprep.subr.mxu0 0.0
    %251 = vmatpush1.msra.mxu0 0.0
    %252 = vmatprep.subr.mxu0 0.0
    %253 = vmatpush1.msra.mxu0 0.0
    %254 = vmatprep.subr.mxu0 0.0
    %255 = vmatpush1.msra.mxu0 0.0
    %256 = vmatprep.subr.mxu0 0.0
    %257 = vmatpush1.msra.mxu0 0.0
    %258 = vmatprep.subr.mxu0 0.0
    %259 = vmatpush1.msra.mxu0 0.0
    %260 = vmatprep.subr.mxu0 0.0
    %261 = vmatpush1.msra.mxu0 0.0
    %262 = vmatprep.subr.mxu0 0.0
    %263 = vmatpush1.msra.mxu0 0.0
    %264 = vmatprep.subr.mxu0 0.0
    %265 = vmatpush1.msra.mxu0 0.0
    %266 = vmatprep.mubr.f32.mxu0 0.0
    %267 = vmatmul.mubr.f32.gmra.mrb[0].mxu0 %v189
    %v268 = vpop.f32.mrb[0].mxu0
    %v269 = vadd.f32 %v195, %v268
    %v270 = vpop.f32.mrb[0].mxu0
    %v271 = vadd.f32 %v199, %v270
    %272 = vdwg.mxu0
    %273 = vst [vmem:[#allocation8] sm:$0xff] %v269
    %v274 = vmul.f32 %v271, 1.442695
    %v275 = vpow.pop %v274
    %276 = vst [vmem:[#allocation9] sm:$0xff] %v275
    // Predicated region
    $region34: #{tpu_custom_call.1} parent=1 // pred_check
      _
    $region35: #{tpu_custom_call.1} parent=1 // pred_check_branch
      %278 = sbr.rel (0) target = $region37
    $region36: #{tpu_custom_call.1} parent=1 // pred_region
      %s280 = ssub.s32 128, 128
      %281 = vsyncadd [#allocation4], %s280
      %s283 = sshll.u32 [#allocation8], 4
      %s284 = int_to_ptr.vmem [resolvable:$true] %s283
      %286 = dma.vmem_to_hbm [thread:$0]  %s284, 128, %s5, [#allocation4]
    $region37: #{tpu_custom_call.1} parent=1 // pred_fallthru
      _
    // Predicated region
    $region38: #{tpu_custom_call.1} parent=1 // pred_check
      _
    $region39: #{tpu_custom_call.1} parent=1 // pred_check_branch
      %288 = sbr.rel (0) target = $region41
    $region40: #{tpu_custom_call.1} parent=1 // pred_region
      %s290 = ssub.s32 128, 128
      %291 = vsyncadd [#allocation10], %s290
      %s293 = sshll.u32 [#allocation9], 4
      %s294 = int_to_ptr.vmem [resolvable:$true] %s293
      %296 = dma.vmem_to_hbm [thread:$0]  %s294, 128, %s6, [#allocation10]
    $region41: #{tpu_custom_call.1} parent=1 // pred_fallthru
      _
    // Predicated region
    $region42: #{tpu_custom_call.1} parent=1 // pred_check
      _
    $region43: #{tpu_custom_call.1} parent=1 // pred_check_branch
      %298 = sbr.rel (0) target = $region45
    $region44: #{tpu_custom_call.1} parent=1 // pred_region
      %299 = dma.done [#allocation4], 128
    $region45: #{tpu_custom_call.1} parent=1 // pred_fallthru
      _
    // Predicated region
    $region46: #{tpu_custom_call.1} parent=1 // pred_check
      _
    $region47: #{tpu_custom_call.1} parent=1 // pred_check_branch
      %301 = sbr.rel (0) target = $region49
    $region48: #{tpu_custom_call.1} parent=1 // pred_region
      %302 = dma.done [#allocation10], 128
    $region49: #{tpu_custom_call.1} parent=1 // pred_fallthru
      _
    %303 = vsyncpa [#allocation3], 1
    %304 = vsyncpa [#allocation6], 1
    %305 = vsyncpa [#allocation4], 1
    %306 = vsyncpa [#allocation10], 1

// kernel: tpu_custom_call.1
$region0: #{tpu_custom_call.1}
  #allocation0 [shape = 'u32[]', space=smem, size = 0x4, offset = 0x4, fixed_abs, tag = 'smem constant byte address 0x4 - core index']
  #allocation1 [shape = 'u32[144,128]{1,0:T(1,128)}', space=vmem, size = 0x12000, scoped, tag = 'internal scratch']
  %s0 = inlined_call_operand.hbm [shape: f32[8,128], index: 0, kind: input, shape index: {}]
  %s1 = inlined_call_operand.hbm [shape: f32[128,128], index: 1, kind: input, shape index: {}]
  %s2 = inlined_call_operand.vmem [shape: f32[1,128], index: 2, kind: input, shape index: {}]
  %s3 = inlined_call_operand.hbm [shape: f32[128,256], index: 3, kind: input, shape index: {}]
  %s4 = inlined_call_operand.vmem [shape: f32[1,256], index: 4, kind: input, shape index: {}]
  %s5 = inlined_call_operand.hbm [shape: f32[8,128], index: 5, kind: output, shape index: {0}]
  %s6 = inlined_call_operand.hbm [shape: f32[8,128], index: 6, kind: output, shape index: {1}]
  %7 = xla_tuple %s5, %s6
  %s8 = sld [smem:[#allocation0]]
  $region50: #{tpu_custom_call.1} parent=0
    _
  %s10 = ssub.s32 1, %s8
  %s11 = scalar_select 0, %s10, %s8
  $region1: #{tpu_custom_call.1} parent=0
    #allocation2 [shape = 'u8[4096]{0}', space=vmem, size = 0x1000, scoped, tag = 'input window, operand 0, single buffered']
    #allocation3 [shape = 's32[1]{0}', space=sflag, size = 0x4, scoped, tag = 'scoped memory for tpu_custom_call.1']
    #allocation4 [shape = 's32[1]{0}', space=sflag, size = 0x4, scoped, tag = 'scoped memory for tpu_custom_call.1']
    #allocation5 [shape = 'u8[65536]{0}', space=vmem, size = 0x10000, scoped, tag = 'input window, operand 1, single buffered']
    #allocation6 [shape = 's32[1]{0}', space=sflag, size = 0x4, scoped, tag = 'scoped memory for tpu_custom_call.1']
    #allocation7 [shape = 'u8[131072]{0}', space=vmem, size = 0x20000, scoped, tag = 'input window, operand 3, single buffered']
    #allocation8 [shape = 'u8[4096]{0}', space=vmem, size = 0x1000, scoped, tag = 'output window, operand 0, single buffered']
    #allocation9 [shape = 'u8[4096]{0}', space=vmem, size = 0x1000, scoped, tag = 'output window, operand 1, single buffered']
    #allocation10 [shape = 's32[1]{0}', space=sflag, size = 0x4, scoped, tag = 'scoped memory for tpu_custom_call.1']
    %12 = vsyncpa [#allocation3], 0
    %13 = vsyncpa [#allocation6], 0
    %14 = vsyncpa [#allocation4], 0
    %15 = vsyncpa [#allocation10], 0
    // Predicated region
    $region2: #{tpu_custom_call.1} parent=1 // pred_check
      _
    $region3: #{tpu_custom_call.1} parent=1 // pred_check_branch
      %17 = sbr.rel (0) target = $region5
    $region4: #{tpu_custom_call.1} parent=1 // pred_region
      %s19 = ssub.s32 128, 128
      %20 = vsyncadd [#allocation3], %s19
      %s22 = sshll.u32 [#allocation2], 4
      %s23 = int_to_ptr.vmem [resolvable:$true] %s22
      %25 = dma.hbm_to_vmem [thread:$0]  %s0, 128, %s23, [#allocation3]
    $region5: #{tpu_custom_call.1} parent=1 // pred_fallthru
      _
    // Predicated region
    $region6: #{tpu_custom_call.1} parent=1 // pred_check
      _
    $region7: #{tpu_custom_call.1} parent=1 // pred_check_branch
      %27 = sbr.rel (0) target = $region9
    $region8: #{tpu_custom_call.1} parent=1 // pred_region
      %s29 = ssub.s32 2048, 2048
      %30 = vsyncadd [#allocation6], %s29
      %s31 = sshll.u32 [#allocation5], 4
      %s32 = int_to_ptr.vmem [resolvable:$true] %s31
      %37 = dma.hbm_to_vmem [thread:$0]  %s1, 2048, %s32, [#allocation6], 128, 128, 8
    $region9: #{tpu_custom_call.1} parent=1 // pred_fallthru
      _
    // Predicated region
    $region10: #{tpu_custom_call.1} parent=1 // pred_check
      _
    $region11: #{tpu_custom_call.1} parent=1 // pred_check_branch
      %39 = sbr.rel (0) target = $region13
    $region12: #{tpu_custom_call.1} parent=1 // pred_region
      _
    $region13: #{tpu_custom_call.1} parent=1 // pred_fallthru
      _
    // Predicated region
    $region14: #{tpu_custom_call.1} parent=1 // pred_check
      _
    $region15: #{tpu_custom_call.1} parent=1 // pred_check_branch
      %41 = sbr.rel (0) target = $region17
    $region16: #{tpu_custom_call.1} parent=1 // pred_region
      %s43 = ssub.s32 4096, 4096
      %44 = vsyncadd [#allocation6], %s43
      %s45 = sshll.u32 [#allocation7], 4
      %s46 = int_to_ptr.vmem [resolvable:$true] %s45
      %51 = dma.hbm_to_vmem [thread:$0]  %s3, 4096, %s46, [#allocation6], 256, 256, 16
    $region17: #{tpu_custom_call.1} parent=1 // pred_fallthru
      _
    // Predicated region
    $region18: #{tpu_custom_call.1} parent=1 // pred_check
      _
    $region19: #{tpu_custom_call.1} parent=1 // pred_check_branch
      %53 = sbr.rel (0) target = $region21
    $region20: #{tpu_custom_call.1} parent=1 // pred_region
      _
    $region21: #{tpu_custom_call.1} parent=1 // pred_fallthru
      _
    // Predicated region
    $region22: #{tpu_custom_call.1} parent=1 // pred_check
      _
    $region23: #{tpu_custom_call.1} parent=1 // pred_check_branch
      %55 = sbr.rel (0) target = $region25
    $region24: #{tpu_custom_call.1} parent=1 // pred_region
      %56 = dma.done [#allocation3], 128
    $region25: #{tpu_custom_call.1} parent=1 // pred_fallthru
      _
    // Predicated region
    $region26: #{tpu_custom_call.1} parent=1 // pred_check
      _
    $region27: #{tpu_custom_call.1} parent=1 // pred_check_branch
      %58 = sbr.rel (0) target = $region29
    $region28: #{tpu_custom_call.1} parent=1 // pred_region
      %59 = dma.done [#allocation6], 2048
    $region29: #{tpu_custom_call.1} parent=1 // pred_fallthru
      _
    // Predicated region
    $region30: #{tpu_custom_call.1} parent=1 // pred_check
      _
    $region31: #{tpu_custom_call.1} parent=1 // pred_check_branch
      %61 = sbr.rel (0) target = $region33
    $region32: #{tpu_custom_call.1} parent=1 // pred_region
      %62 = dma.done [#allocation6], 4096
    $region33: #{tpu_custom_call.1} parent=1 // pred_fallthru
      _
    %v63 = vld [vmem:[#allocation5] sm:$0xff]
    %v64 = vld [vmem:[#allocation5 + $0x8] sm:$0xff]
    %v65 = vld [vmem:[#allocation5 + $0x10] sm:$0xff]
    %v66 = vld [vmem:[#allocation5 + $0x18] sm:$0xff]
    %v67 = vld [vmem:[#allocation5 + $0x20] sm:$0xff]
    %v68 = vld [vmem:[#allocation5 + $0x28] sm:$0xff]
    %v69 = vld [vmem:[#allocation5 + $0x30] sm:$0xff]
    %v70 = vld [vmem:[#allocation5 + $0x38] sm:$0xff]
    %v71 = vld [vmem:[#allocation5 + $0x40] sm:$0xff]
    %v72 = vld [vmem:[#allocation5 + $0x48] sm:$0xff]
    %v73 = vld [vmem:[#allocation5 + $0x50] sm:$0xff]
    %v74 = vld [vmem:[#allocation5 + $0x58] sm:$0xff]
    %v75 = vld [vmem:[#allocation5 + $0x60] sm:$0xff]
    %v76 = vld [vmem:[#allocation5 + $0x68] sm:$0xff]
    %v77 = vld [vmem:[#allocation5 + $0x70] sm:$0xff]
    %v78 = vld [vmem:[#allocation5 + $0x78] sm:$0xff]
    %v79 = vld [vmem:[#allocation7] sm:$0xff]
    %v80 = vld [vmem:[#allocation7 + $0x8] sm:$0xff]
    %v81 = vld [vmem:[#allocation7 + $0x10] sm:$0xff]
    %v82 = vld [vmem:[#allocation7 + $0x18] sm:$0xff]
    %v83 = vld [vmem:[#allocation7 + $0x20] sm:$0xff]
    %v84 = vld [vmem:[#allocation7 + $0x28] sm:$0xff]
    %v85 = vld [vmem:[#allocation7 + $0x30] sm:$0xff]
    %v86 = vld [vmem:[#allocation7 + $0x38] sm:$0xff]
    %v87 = vld [vmem:[#allocation7 + $0x40] sm:$0xff]
    %v88 = vld [vmem:[#allocation7 + $0x48] sm:$0xff]
    %v89 = vld [vmem:[#allocation7 + $0x50] sm:$0xff]
    %v90 = vld [vmem:[#allocation7 + $0x58] sm:$0xff]
    %v91 = vld [vmem:[#allocation7 + $0x60] sm:$0xff]
    %v92 = vld [vmem:[#allocation7 + $0x68] sm:$0xff]
    %v93 = vld [vmem:[#allocation7 + $0x70] sm:$0xff]
    %v94 = vld [vmem:[#allocation7 + $0x78] sm:$0xff]
    %v95 = vld [vmem:[#allocation7 + $0x80] sm:$0xff]
    %v96 = vld [vmem:[#allocation7 + $0x88] sm:$0xff]
    %v97 = vld [vmem:[#allocation7 + $0x90] sm:$0xff]
    %v98 = vld [vmem:[#allocation7 + $0x98] sm:$0xff]
    %v99 = vld [vmem:[#allocation7 + $0xa0] sm:$0xff]
    %v100 = vld [vmem:[#allocation7 + $0xa8] sm:$0xff]
    %v101 = vld [vmem:[#allocation7 + $0xb0] sm:$0xff]
    %v102 = vld [vmem:[#allocation7 + $0xb8] sm:$0xff]
    %v103 = vld [vmem:[#allocation7 + $0xc0] sm:$0xff]
    %v104 = vld [vmem:[#allocation7 + $0xc8] sm:$0xff]
    %v105 = vld [vmem:[#allocation7 + $0xd0] sm:$0xff]
    %v106 = vld [vmem:[#allocation7 + $0xd8] sm:$0xff]
    %v107 = vld [vmem:[#allocation7 + $0xe0] sm:$0xff]
    %v108 = vld [vmem:[#allocation7 + $0xe8] sm:$0xff]
    %v109 = vld [vmem:[#allocation7 + $0xf0] sm:$0xff]
    %v110 = vld [vmem:[#allocation7 + $0xf8] sm:$0xff]
    %v111 = vld [vmem:[#allocation2] sm:$0xff]
    %v112 = vld [vmem:[%s2] sm:$0x1]
    %v114 = vlaneseq
    %v115 = vshrl.u32 %v114, 7
    %v116 = vsub.s32 0, %v115
    %v117 = vrot.slane %v112, %v116
    %119 = vmatprep.subr.mxu0 0.0
    %120 = vmatpush1.msra.mxu0 %v63
    %121 = vmatprep.subr.mxu0 0.0
    %122 = vmatpush1.msra.mxu0 %v64
    %123 = vmatprep.subr.mxu0 0.0
    %124 = vmatpush1.msra.mxu0 %v65
    %125 = vmatprep.subr.mxu0 0.0
    %126 = vmatpush1.msra.mxu0 %v66
    %127 = vmatprep.subr.mxu0 0.0
    %128 = vmatpush1.msra.mxu0 %v67
    %129 = vmatprep.subr.mxu0 0.0
    %130 = vmatpush1.msra.mxu0 %v68
    %131 = vmatprep.subr.mxu0 0.0
    %132 = vmatpush1.msra.mxu0 %v69
    %133 = vmatprep.subr.mxu0 0.0
    %134 = vmatpush1.msra.mxu0 %v70
    %135 = vmatprep.subr.mxu0 0.0
    %136 = vmatpush1.msra.mxu0 %v71
    %137 = vmatprep.subr.mxu0 0.0
    %138 = vmatpush1.msra.mxu0 %v72
    %139 = vmatprep.subr.mxu0 0.0
    %140 = vmatpush1.msra.mxu0 %v73
    %141 = vmatprep.subr.mxu0 0.0
    %142 = vmatpush1.msra.mxu0 %v74
    %143 = vmatprep.subr.mxu0 0.0
    %144 = vmatpush1.msra.mxu0 %v75
    %145 = vmatprep.subr.mxu0 0.0
    %146 = vmatpush1.msra.mxu0 %v76
    %147 = vmatprep.subr.mxu0 0.0
    %148 = vmatpush1.msra.mxu0 %v77
    %149 = vmatprep.subr.mxu0 0.0
    %150 = vmatpush1.msra.mxu0 %v78
    %151 = vmatprep.subr.mxu0 0.0
    %152 = vmatpush1.msra.mxu0 0.0
    %153 = vmatprep.subr.mxu0 0.0
    %154 = vmatpush1.msra.mxu0 0.0
    %155 = vmatprep.subr.mxu0 0.0
    %156 = vmatpush1.msra.mxu0 0.0
    %157 = vmatprep.subr.mxu0 0.0
    %158 = vmatpush1.msra.mxu0 0.0
    %159 = vmatprep.subr.mxu0 0.0
    %160 = vmatpush1.msra.mxu0 0.0
    %161 = vmatprep.subr.mxu0 0.0
    %162 = vmatpush1.msra.mxu0 0.0
    %163 = vmatprep.subr.mxu0 0.0
    %164 = vmatpush1.msra.mxu0 0.0
    %165 = vmatprep.subr.mxu0 0.0
    %166 = vmatpush1.msra.mxu0 0.0
    %167 = vmatprep.subr.mxu0 0.0
    %168 = vmatpush1.msra.mxu0 0.0
    %169 = vmatprep.subr.mxu0 0.0
    %170 = vmatpush1.msra.mxu0 0.0
    %171 = vmatprep.subr.mxu0 0.0
    %172 = vmatpush1.msra.mxu0 0.0
    %173 = vmatprep.subr.mxu0 0.0
    %174 = vmatpush1.msra.mxu0 0.0
    %175 = vmatprep.subr.mxu0 0.0
    %176 = vmatpush1.msra.mxu0 0.0
    %177 = vmatprep.subr.mxu0 0.0
    %178 = vmatpush1.msra.mxu0 0.0
    %179 = vmatprep.subr.mxu0 0.0
    %180 = vmatpush1.msra.mxu0 0.0
    %181 = vmatprep.subr.mxu0 0.0
    %182 = vmatpush1.msra.mxu0 0.0
    %183 = vmatprep.mubr.f32.mxu0 0.0
    %184 = vmatmul.mubr.f32.gmra.mrb[0].mxu0 %v111
    %v185 = vpop.f32.mrb[0].mxu0
    %v186 = vadd.f32 %v117, %v185
    %v187 = vpop.f32.mrb[0].mxu0
    %188 = vdwg.mxu0
    %v189 = vtanh.pop %v186
    %v190 = vld [vmem:[%s4] sm:$0x3]
    %v192 = vlaneseq
    %v193 = vshrl.u32 %v192, 7
    %v194 = vsub.s32 0, %v193
    %v195 = vrot.slane %v190, %v194
    %v196 = vlaneseq
    %v197 = vshrl.u32 %v196, 7
    %v198 = vsub.s32 1, %v197
    %v199 = vrot.slane %v190, %v198
    %202 = vmatprep.subr.mxu0 %v80
    %203 = vmatpush1.msra.mxu0 %v79
    %204 = vmatprep.subr.mxu0 %v82
    %205 = vmatpush1.msra.mxu0 %v81
    %206 = vmatprep.subr.mxu0 %v84
    %207 = vmatpush1.msra.mxu0 %v83
    %208 = vmatprep.subr.mxu0 %v86
    %209 = vmatpush1.msra.mxu0 %v85
    %210 = vmatprep.subr.mxu0 %v88
    %211 = vmatpush1.msra.mxu0 %v87
    %212 = vmatprep.subr.mxu0 %v90
    %213 = vmatpush1.msra.mxu0 %v89
    %214 = vmatprep.subr.mxu0 %v92
    %215 = vmatpush1.msra.mxu0 %v91
    %216 = vmatprep.subr.mxu0 %v94
    %217 = vmatpush1.msra.mxu0 %v93
    %218 = vmatprep.subr.mxu0 %v96
    %219 = vmatpush1.msra.mxu0 %v95
    %220 = vmatprep.subr.mxu0 %v98
    %221 = vmatpush1.msra.mxu0 %v97
    %222 = vmatprep.subr.mxu0 %v100
    %223 = vmatpush1.msra.mxu0 %v99
    %224 = vmatprep.subr.mxu0 %v102
    %225 = vmatpush1.msra.mxu0 %v101
    %226 = vmatprep.subr.mxu0 %v104
    %227 = vmatpush1.msra.mxu0 %v103
    %228 = vmatprep.subr.mxu0 %v106
    %229 = vmatpush1.msra.mxu0 %v105
    %230 = vmatprep.subr.mxu0 %v108
    %231 = vmatpush1.msra.mxu0 %v107
    %232 = vmatprep.subr.mxu0 %v110
    %233 = vmatpush1.msra.mxu0 %v109
    %234 = vmatprep.subr.mxu0 0.0
    %235 = vmatpush1.msra.mxu0 0.0
    %236 = vmatprep.subr.mxu0 0.0
    %237 = vmatpush1.msra.mxu0 0.0
    %238 = vmatprep.subr.mxu0 0.0
    %239 = vmatpush1.msra.mxu0 0.0
    %240 = vmatprep.subr.mxu0 0.0
    %241 = vmatpush1.msra.mxu0 0.0
    %242 = vmatprep.subr.mxu0 0.0
    %243 = vmatpush1.msra.mxu0 0.0
    %244 = vmatprep.subr.mxu0 0.0
    %245 = vmatpush1.msra.mxu0 0.0
    %246 = vmatprep.subr.mxu0 0.0
    %247 = vmatpush1.msra.mxu0 0.0
    %248 = vmatprep.subr.mxu0 0.0
    %249 = vmatpush1.msra.mxu0 0.0
    %250 = vmatprep.subr.mxu0 0.0
    %251 = vmatpush1.msra.mxu0 0.0
    %252 = vmatprep.subr.mxu0 0.0
    %253 = vmatpush1.msra.mxu0 0.0
    %254 = vmatprep.subr.mxu0 0.0
    %255 = vmatpush1.msra.mxu0 0.0
    %256 = vmatprep.subr.mxu0 0.0
    %257 = vmatpush1.msra.mxu0 0.0
    %258 = vmatprep.subr.mxu0 0.0
    %259 = vmatpush1.msra.mxu0 0.0
    %260 = vmatprep.subr.mxu0 0.0
    %261 = vmatpush1.msra.mxu0 0.0
    %262 = vmatprep.subr.mxu0 0.0
    %263 = vmatpush1.msra.mxu0 0.0
    %264 = vmatprep.subr.mxu0 0.0
    %265 = vmatpush1.msra.mxu0 0.0
    %266 = vmatprep.mubr.f32.mxu0 0.0
    %267 = vmatmul.mubr.f32.gmra.mrb[0].mxu0 %v189
    %v268 = vpop.f32.mrb[0].mxu0
    %v269 = vadd.f32 %v195, %v268
    %v270 = vpop.f32.mrb[0].mxu0
    %v271 = vadd.f32 %v199, %v270
    %272 = vdwg.mxu0
    %273 = vst [vmem:[#allocation8] sm:$0xff] %v269
    %v274 = vmul.f32 %v271, 1.442695
    %v275 = vpow.pop %v274
    %276 = vst [vmem:[#allocation9] sm:$0xff] %v275
    // Predicated region
    $region34: #{tpu_custom_call.1} parent=1 // pred_check
      _
    $region35: #{tpu_custom_call.1} parent=1 // pred_check_branch
      %278 = sbr.rel (0) target = $region37
    $region36: #{tpu_custom_call.1} parent=1 // pred_region
      %s280 = ssub.s32 128, 128
      %281 = vsyncadd [#allocation4], %s280
      %s283 = sshll.u32 [#allocation8], 4
      %s284 = int_to_ptr.vmem [resolvable:$true] %s283
      %286 = dma.vmem_to_hbm [thread:$0]  %s284, 128, %s5, [#allocation4]
    $region37: #{tpu_custom_call.1} parent=1 // pred_fallthru
      _
    // Predicated region
    $region38: #{tpu_custom_call.1} parent=1 // pred_check
      _
    $region39: #{tpu_custom_call.1} parent=1 // pred_check_branch
      %288 = sbr.rel (0) target = $region41
    $region40: #{tpu_custom_call.1} parent=1 // pred_region
      %s290 = ssub.s32 128, 128
      %291 = vsyncadd [#allocation10], %s290
      %s293 = sshll.u32 [#allocation9], 4
      %s294 = int_to_ptr.vmem [resolvable:$true] %s293
      %296 = dma.vmem_to_hbm [thread:$0]  %s294, 128, %s6, [#allocation10]
    $region41: #{tpu_custom_call.1} parent=1 // pred_fallthru
      _
    // Predicated region
    $region42: #{tpu_custom_call.1} parent=1 // pred_check
      _
    $region43: #{tpu_custom_call.1} parent=1 // pred_check_branch
      %298 = sbr.rel (0) target = $region45
    $region44: #{tpu_custom_call.1} parent=1 // pred_region
      %299 = dma.done [#allocation4], 128
    $region45: #{tpu_custom_call.1} parent=1 // pred_fallthru
      _
    // Predicated region
    $region46: #{tpu_custom_call.1} parent=1 // pred_check
      _
    $region47: #{tpu_custom_call.1} parent=1 // pred_check_branch
      %301 = sbr.rel (0) target = $region49
    $region48: #{tpu_custom_call.1} parent=1 // pred_region
      %302 = dma.done [#allocation10], 128
    $region49: #{tpu_custom_call.1} parent=1 // pred_fallthru
      _
    %303 = vsyncpa [#allocation3], 1
    %304 = vsyncpa [#allocation6], 1
    %305 = vsyncpa [#allocation4], 1
    %306 = vsyncpa [#allocation10], 1

</llo_original>
